<compile_context>
chip_gen: v6e
topology: v6e:2x2x1
jax: 0.10.0
libtpu: 0.0.40
codegen_flags: <defaults>
</compile_context>

<pallas_src>
import math
import functools

import jax
import jax.numpy as jnp
from jax.experimental import pallas as pl
from jax.experimental.pallas import tpu as pltpu


NEG_INF = -1e30  # finite mask value: safe even for fully-masked rows


def _pick_tile(dim, candidates):
    """Largest candidate tile that evenly divides `dim`, else the full dim."""
    for c in candidates:
        if c <= dim and dim % c == 0:
            return c
    return dim


@functools.lru_cache(maxsize=None)
def _vmem_limit_bytes():
    """Generation-aware VMEM budget (v7x: 64 MiB physical, v5e/v6e: 128 MiB)."""
    try:
        cap = pltpu.get_tpu_info().vmem_capacity_bytes
    except Exception:
        cap = 64 * 1024 * 1024
    return int(min(48 * 1024 * 1024, (3 * cap) // 4))


# --------------------------- tiled linear (y = x @ W^T + b) ---------------------------

def linear_kernel(x_ref, w_ref, b_ref, o_ref, acc_ref):
    kk = pl.program_id(2)

    @pl.when(kk == 0)
    def _init():
        acc_ref[...] = jnp.zeros_like(acc_ref)

    # bf16 operands, f32 accumulation -> MXU bf16 peak (w is already bf16).
    acc_ref[...] += jnp.dot(x_ref[...].astype(jnp.bfloat16),
                            w_ref[...].astype(jnp.bfloat16),
                            preferred_element_type=jnp.float32)

    @pl.when(kk == pl.num_programs(2) - 1)
    def _finalize():
        o_ref[...] = (acc_ref[...] + b_ref[...]).astype(o_ref.dtype)


def linear(x2d, w_t, b):
    """x2d: (M, K) f32, w_t: (K, N) pre-transposed (bf16) weight, b: (N,) f32."""
    M, K = x2d.shape
    K2, N = w_t.shape
    assert K == K2

    tm = _pick_tile(M, (256, 128))
    tn = _pick_tile(N, (512, 256, 128))
    tk = _pick_tile(K, (512, 256, 128))

    grid = (M // tm, N // tn, K // tk)

    return pl.pallas_call(
        linear_kernel,
        out_shape=jax.ShapeDtypeStruct((M, N), x2d.dtype),
        grid_spec=pltpu.PrefetchScalarGridSpec(
            num_scalar_prefetch=0,
            grid=grid,
            in_specs=[
                pl.BlockSpec((tm, tk), lambda i, j, k: (i, k)),
                pl.BlockSpec((tk, tn), lambda i, j, k: (k, j)),
                pl.BlockSpec((1, tn), lambda i, j, k: (0, j)),
            ],
            out_specs=pl.BlockSpec((tm, tn), lambda i, j, k: (i, j)),
            scratch_shapes=[pltpu.VMEM((tm, tn), jnp.float32)],
        ),
        compiler_params=pltpu.CompilerParams(
            dimension_semantics=("parallel", "parallel", "arbitrary"),
            vmem_limit_bytes=_vmem_limit_bytes(),
        ),
    )(x2d, w_t, b.reshape(1, N))


# ------------------------- flash attention core (causal) -------------------------

def flash_attn_kernel(q_ref, k_ref, v_ref, o_ref, m_sc, l_sc, acc_sc, *, tq, tk):
    qi = pl.program_id(1)
    ki = pl.program_id(2)

    q_start = qi * tq
    k_start = ki * tk
    # last causally relevant kv block for this q tile
    last_valid = ((qi + 1) * tq - 1) // tk

    @pl.when(ki == 0)
    def _init():
        m_sc[...] = jnp.full_like(m_sc, NEG_INF)
        l_sc[...] = jnp.zeros_like(l_sc)
        acc_sc[...] = jnp.zeros_like(acc_sc)

    def _update(apply_mask):
        q = q_ref[0]                                   # (tq, hd) f32, pre-scaled
        k = k_ref[0]                                   # (tk, hd)
        v = v_ref[0]                                   # (tk, hd)

        # bf16 operands, f32 accumulation; contract last dims directly -> no
        # physical K transpose.  softmax scale already folded into Q.
        s = jax.lax.dot_general(
            q.astype(jnp.bfloat16), k.astype(jnp.bfloat16),
            (((1,), (1,)), ((), ())),
            preferred_element_type=jnp.float32)        # (tq, tk)

        if apply_mask:
            # only diagonal-straddling tiles pay for the mask build
            row = q_start + jax.lax.broadcasted_iota(jnp.int32, (tq, tk), 0)
            col = k_start + jax.lax.broadcasted_iota(jnp.int32, (tq, tk), 1)
            s = jnp.where(col <= row, s, NEG_INF)

        # online softmax update (kept in f32: no bf16 VPU/EUP on v5e)
        m_prev = m_sc[...]
        m_new = jnp.maximum(m_prev, jnp.max(s, axis=-1, keepdims=True))
        alpha = jnp.exp(m_prev - m_new)
        p = jnp.exp(s - m_new)
        l_sc[...] = alpha * l_sc[...] + jnp.sum(p, axis=-1, keepdims=True)
        acc_sc[...] = alpha * acc_sc[...] + jnp.dot(
            p.astype(jnp.bfloat16), v.astype(jnp.bfloat16),
            preferred_element_type=jnp.float32)
        m_sc[...] = m_new

    valid = k_start <= q_start + tq - 1               # tile overlaps causal region
    full_tile = (k_start + tk - 1) <= q_start         # entirely below the diagonal

    @pl.when(jnp.logical_and(valid, full_tile))
    def _no_mask():
        _update(apply_mask=False)

    @pl.when(jnp.logical_and(valid, jnp.logical_not(full_tile)))
    def _with_mask():
        _update(apply_mask=True)

    # early finalize: don't wait for the (DMA-clamped, no-op) trailing ki steps
    @pl.when(ki == last_valid)
    def _finalize():
        inv_l = pl.reciprocal(l_sc[...])               # exact; once per q tile
        o_ref[0] = (acc_sc[...] * inv_l).astype(o_ref.dtype)


def flash_attention(q, k, v):
    """q, k, v: (B*H, T, hd) -> (B*H, T, hd), causal attention (q is pre-scaled)."""
    BH, T, hd = q.shape
    tq = _pick_tile(T, (512, 256, 128))
    tk = _pick_tile(T, (512, 256, 128))

    kernel = functools.partial(flash_attn_kernel, tq=tq, tk=tk)

    # clamp K/V block index to the last causally-valid block: skipped trailing
    # iterations re-map to the same block -> no above-diagonal K/V DMA.
    def kv_map(bh, qi, ki):
        return (bh, jnp.minimum(ki, ((qi + 1) * tq - 1) // tk), 0)

    return pl.pallas_call(
        kernel,
        out_shape=jax.ShapeDtypeStruct((BH, T, hd), q.dtype),
        grid_spec=pltpu.PrefetchScalarGridSpec(
            num_scalar_prefetch=0,
            grid=(BH, T // tq, T // tk),
            in_specs=[
                pl.BlockSpec((1, tq, hd), lambda bh, qi, ki: (bh, qi, 0)),
                pl.BlockSpec((1, tk, hd), kv_map),
                pl.BlockSpec((1, tk, hd), kv_map),
            ],
            out_specs=pl.BlockSpec((1, tq, hd), lambda bh, qi, ki: (bh, qi, 0)),
            scratch_shapes=[
                pltpu.VMEM((tq, 1), jnp.float32),   # running max m
                pltpu.VMEM((tq, 1), jnp.float32),   # running denom l
                pltpu.VMEM((tq, hd), jnp.float32),  # output accumulator
            ],
        ),
        compiler_params=pltpu.CompilerParams(
            dimension_semantics=("parallel", "parallel", "arbitrary"),
            vmem_limit_bytes=_vmem_limit_bytes(),
        ),
    )(q, k, v)


# ------------------------------- forward pass ------------------------------

def attention_forward(x, params, n_head):
    B, T, C = x.shape
    hd = C // n_head
    sm_scale = 1.0 / math.sqrt(hd)

    # Weight prep (one-time, on parameters):
    #  * transpose to (Cin, Cout) so kernels never do w.T
    #  * fold the softmax scale into the Q columns of w_attn / b_attn
    #  * cast weights to bf16 (halves weight DMA; MXU runs bf16 anyway)
    col_scale = jnp.concatenate([
        jnp.full((C,), sm_scale, dtype=jnp.float32),
        jnp.ones((2 * C,), dtype=jnp.float32),
    ])
    w_attn_t = (params["w_attn"].T * col_scale[None, :]).astype(jnp.bfloat16)  # (C, 3C)
    b_attn = params["b_attn"] * col_scale                                      # (3C,)
    w_proj_t = params["w_proj"].T.astype(jnp.bfloat16)                         # (C, C)

    # c_attn projection (tiled Pallas matmul, bf16 MXU / f32 acc)
    qkv = linear(x.reshape(B * T, C), w_attn_t, b_attn)
    qkv = qkv.reshape(B, T, 3 * C)
    q, k, v = jnp.split(qkv, 3, axis=2)

    # glue: split into heads (XLA reshape/transpose)
    # TODO(synk): fuse qkv/head split + head merge into the kernels' BlockSpecs
    #             when head_dim is a multiple of 128 (lane-dense out blocks).
    def to_heads(t):
        return t.reshape(B, T, n_head, hd).transpose(0, 2, 1, 3).reshape(B * n_head, T, hd)
    q, k, v = to_heads(q), to_heads(k), to_heads(v)

    # flash-attention core (online softmax, causal DMA + compute skipping)
    y = flash_attention(q, k, v)                               # (B*H, T, hd)

    # merge heads + c_proj projection (tiled Pallas matmul)
    y = y.reshape(B, n_head, T, hd).transpose(0, 2, 1, 3).reshape(B * T, C)
    out = linear(y, w_proj_t, params["b_proj"])
    return out.reshape(B, T, C)


# pure-JAX reference (mirrors the PyTorch forward) for correctness checking
def attention_reference(x, params, n_head):
    B, T, C = x.shape
    hd = C // n_head
    qkv = x @ params["w_attn"].T + params["b_attn"]
    q, k, v = jnp.split(qkv, 3, axis=2)
    q = q.reshape(B, T, n_head, hd).transpose(0, 2, 1, 3)
    k = k.reshape(B, T, n_head, hd).transpose(0, 2, 1, 3)
    v = v.reshape(B, T, n_head, hd).transpose(0, 2, 1, 3)
    att = (q @ k.transpose(0, 1, 3, 2)) * (1.0 / math.sqrt(hd))
    mask = jnp.tril(jnp.ones((T, T), dtype=bool))
    att = jnp.where(mask[None, None], att, -jnp.inf)
    att = jax.nn.softmax(att, axis=-1)
    y = (att @ v).transpose(0, 2, 1, 3).reshape(B, T, C)
    return y @ params["w_proj"].T + params["b_proj"]


# ----------------------------------- main -----------------------------------

if __name__ == "__main__":
    B, T = 2, 8
    n_embd, n_head = 32, 4      # block_size = T = 8

    key = jax.random.PRNGKey(0)
    kx, k1, k2, k3, k4 = jax.random.split(key, 5)

    x = jax.random.normal(kx, (B, T, n_embd), dtype=jnp.float32)

    params = {
        "w_attn": 0.02 * jax.random.normal(k1, (3 * n_embd, n_embd), jnp.float32),
        "b_attn": 0.02 * jax.random.normal(k2, (3 * n_embd,), jnp.float32),
        "w_proj": 0.02 * jax.random.normal(k3, (n_embd, n_embd), jnp.float32),
        "b_proj": 0.02 * jax.random.normal(k4, (n_embd,), jnp.float32),
    }

    out = attention_forward(x, params, n_head)
    out = jax.block_until_ready(out)

    ref = attention_reference(x, params, n_head)
    assert out.shape == (B, T, n_embd)
    # tolerance accounts for bf16 MXU operands (f32 accumulation, f32 reference)
    assert jnp.allclose(out, ref, rtol=2e-2, atol=2e-3), "mismatch vs reference"

    print("KERNEL_OK")
</pallas_src>

<mosaic_0001>
module attributes {stable_mosaic.version = 11 : i64} {
  func.func @linear_kernel(%arg0: i32, %arg1: i32, %arg2: i32, %arg3: memref<16x32xf32, #tpu.memory_space<vmem>>, %arg4: memref<32x96xbf16, #tpu.memory_space<vmem>>, %arg5: memref<1x96xf32, #tpu.memory_space<vmem>>, %arg6: memref<16x96xf32, #tpu.memory_space<vmem>>, %arg7: memref<16x96xf32, #tpu.memory_space<vmem>>) attributes {dimension_semantics = [#tpu.dimension_semantics<parallel>, #tpu.dimension_semantics<parallel>, #tpu.dimension_semantics<arbitrary>], iteration_bounds = array<i64: 1, 1, 1>, scalar_prefetch = 0 : i64, scratch_operands = 1 : i64, tpu.core_type = #tpu.core_type<tc>, window_params = [{transform_indices = @transform_0, window_bounds = array<i64: 16, 32>}, {transform_indices = @transform_1, window_bounds = array<i64: 32, 96>}, {transform_indices = @transform_2, window_bounds = array<i64: 1, 96>}, {transform_indices = @transform_3, window_bounds = array<i64: 16, 96>}]} {
    %c0_i32 = arith.constant 0 : i32
    %0 = arith.cmpi eq, %arg2, %c0_i32 : i32
    %1 = arith.extui %0 : i1 to i32
    %c0_i32_0 = arith.constant 0 : i32
    %2 = arith.cmpi ne, %1, %c0_i32_0 : i32
    scf.if %2 {
      %cst_10 = arith.constant 0.000000e+00 : f32
      %13 = vector.broadcast %cst_10 : f32 to vector<16x96xf32>
      %c0_11 = arith.constant 0 : index
      %c0_12 = arith.constant 0 : index
      %14 = vector.load %arg7[%c0_11, %c0_12] : memref<16x96xf32, #tpu.memory_space<vmem>>, vector<16x96xf32>
      tpu.vector_store %arg7[%c0_11, %c0_12], %13 {strides = array<i32>} : memref<16x96xf32, #tpu.memory_space<vmem>>, vector<16x96xf32>,
    } else {
    }
    %c0 = arith.constant 0 : index
    %c0_1 = arith.constant 0 : index
    %3 = vector.load %arg7[%c0, %c0_1] : memref<16x96xf32, #tpu.memory_space<vmem>>, vector<16x96xf32>
    %c0_2 = arith.constant 0 : index
    %c0_3 = arith.constant 0 : index
    %4 = vector.load %arg3[%c0_2, %c0_3] : memref<16x32xf32, #tpu.memory_space<vmem>>, vector<16x32xf32>
    %5 = arith.truncf %4 : vector<16x32xf32> to vector<16x32xbf16>
    %c0_4 = arith.constant 0 : index
    %c0_5 = arith.constant 0 : index
    %6 = vector.load %arg4[%c0_4, %c0_5] : memref<32x96xbf16, #tpu.memory_space<vmem>>, vector<32x96xbf16>
    %cst = arith.constant dense<0.000000e+00> : vector<16x96xf32>
    %7 = tpu.matmul %5, %6, %cst {dimension_numbers = #tpu.dot_dimension_numbers<[1], [0], [0], [1], [0, 0, 1, 1], [], []>} : vector<16x32xbf16>, vector<32x96xbf16>, vector<16x96xf32> -> vector<16x96xf32>
    %8 = arith.addf %3, %7 : vector<16x96xf32>
    %c0_6 = arith.constant 0 : index
    %c0_7 = arith.constant 0 : index
    %9 = vector.load %arg7[%c0_6, %c0_7] : memref<16x96xf32, #tpu.memory_space<vmem>>, vector<16x96xf32>
    tpu.vector_store %arg7[%c0_6, %c0_7], %8 {strides = array<i32>} : memref<16x96xf32, #tpu.memory_space<vmem>>, vector<16x96xf32>,
    %c0_i32_8 = arith.constant 0 : i32
    %10 = arith.cmpi eq, %arg2, %c0_i32_8 : i32
    %11 = arith.extui %10 : i1 to i32
    %c0_i32_9 = arith.constant 0 : i32
    %12 = arith.cmpi ne, %11, %c0_i32_9 : i32
    scf.if %12 {
      %c0_10 = arith.constant 0 : index
      %c0_11 = arith.constant 0 : index
      %13 = vector.load %arg7[%c0_10, %c0_11] : memref<16x96xf32, #tpu.memory_space<vmem>>, vector<16x96xf32>
      %c0_12 = arith.constant 0 : index
      %c0_13 = arith.constant 0 : index
      %14 = vector.load %arg5[%c0_12, %c0_13] : memref<1x96xf32, #tpu.memory_space<vmem>>, vector<1x96xf32>
      %15 = vector.broadcast %14 : vector<1x96xf32> to vector<16x96xf32>
      %16 = arith.addf %13, %15 : vector<16x96xf32>
      %c0_14 = arith.constant 0 : index
      %c0_15 = arith.constant 0 : index
      %17 = vector.load %arg6[%c0_14, %c0_15] : memref<16x96xf32, #tpu.memory_space<vmem>>, vector<16x96xf32>
      tpu.vector_store %arg6[%c0_14, %c0_15], %16 {strides = array<i32>} : memref<16x96xf32, #tpu.memory_space<vmem>>, vector<16x96xf32>,
    } else {
    }
    return
  }
  func.func @transform_0(%arg0: i32, %arg1: i32, %arg2: i32) -> (i32, i32) {
    %c0_i32 = arith.constant 0 : i32
    return %arg0, %arg2 : i32, i32
  }
  func.func @transform_1(%arg0: i32, %arg1: i32, %arg2: i32) -> (i32, i32) {
    %c0_i32 = arith.constant 0 : i32
    return %arg2, %arg1 : i32, i32
  }
  func.func @transform_2(%arg0: i32, %arg1: i32, %arg2: i32) -> (i32, i32) {
    %c0_i32 = arith.constant 0 : i32
    %c0_i32_0 = arith.constant 0 : i32
    return %c0_i32, %arg1 : i32, i32
  }
  func.func @transform_3(%arg0: i32, %arg1: i32, %arg2: i32) -> (i32, i32) {
    %c0_i32 = arith.constant 0 : i32
    return %arg0, %arg1 : i32, i32
  }
}

</mosaic_0001>

<llo_original>
// kernel: tpu_custom_call.1
$region0: #{tpu_custom_call.1}
  #allocation0 [shape = 'u32[]', space=smem, size = 0x4, offset = 0x4, fixed_abs, tag = 'smem constant byte address 0x4 - core index']
  #allocation1 [shape = 'u32[144,128]{1,0:T(1,128)}', space=vmem, size = 0x12000, scoped, tag = 'internal scratch']
  #allocation2 [shape = 'f32[16,96]{1,0:T(8,128)}', space=vmem, size = 0x2000, scoped, tag = 'scratch operand']
  %s0 = inlined_call_operand.hbm [shape: f32[16,32], index: 0, kind: input, shape index: {}]
  %s1 = inlined_call_operand.hbm [shape: bf16[32,96], index: 1, kind: input, shape index: {}]
  %s2 = inlined_call_operand.vmem [shape: f32[1,96], index: 2, kind: input, shape index: {}]
  %s3 = inlined_call_operand.hbm [shape: f32[16,96], index: 3, kind: output, shape index: {}]
  %s4 = sld [smem:[#allocation0]]
  $region38: #{tpu_custom_call.1} parent=0
    _
  %s6 = ssub.s32 1, %s4
  %s7 = scalar_select 0, %s6, %s4
  $region1: #{tpu_custom_call.1} parent=0
    #allocation3 [shape = 'u8[8192]{0}', space=vmem, size = 0x2000, scoped, tag = 'input window, operand 0, single buffered']
    #allocation4 [shape = 's32[1]{0}', space=sflag, size = 0x4, scoped, tag = 'scoped memory for tpu_custom_call.1']
    #allocation5 [shape = 's32[1]{0}', space=sflag, size = 0x4, scoped, tag = 'scoped memory for tpu_custom_call.1']
    #allocation6 [shape = 'u8[8192]{0}', space=vmem, size = 0x2000, scoped, tag = 'input window, operand 1, single buffered']
    #allocation7 [shape = 's32[1]{0}', space=sflag, size = 0x4, scoped, tag = 'scoped memory for tpu_custom_call.1']
    #allocation8 [shape = 'u8[8192]{0}', space=vmem, size = 0x2000, scoped, tag = 'output window, operand 0, single buffered']
    %8 = vsyncpa [#allocation4], 0
    %9 = vsyncpa [#allocation7], 0
    %10 = vsyncpa [#allocation5], 0
    // Predicated region
    $region2: #{tpu_custom_call.1} parent=1 // pred_check
      _
    $region3: #{tpu_custom_call.1} parent=1 // pred_check_branch
      %12 = sbr.rel (0) target = $region5
    $region4: #{tpu_custom_call.1} parent=1 // pred_region
      %s14 = ssub.s32 256, 256
      %15 = vsyncadd [#allocation4], %s14
      %s16 = sshll.u32 [#allocation3], 4
      %s17 = int_to_ptr.vmem [resolvable:$true] %s16
      %22 = dma.hbm_to_vmem [thread:$0]  %s0, 256, %s17, [#allocation4], 128, 128, 8
    $region5: #{tpu_custom_call.1} parent=1 // pred_fallthru
      _
    // Predicated region
    $region6: #{tpu_custom_call.1} parent=1 // pred_check
      _
    $region7: #{tpu_custom_call.1} parent=1 // pred_check_branch
      %24 = sbr.rel (0) target = $region9
    $region8: #{tpu_custom_call.1} parent=1 // pred_region
      %s26 = ssub.s32 256, 256
      %27 = vsyncadd [#allocation7], %s26
      %s28 = sshll.u32 [#allocation6], 4
      %s29 = int_to_ptr.vmem [resolvable:$true] %s28
      %34 = dma.hbm_to_vmem [thread:$0]  %s1, 256, %s29, [#allocation7], 64, 64, 4
    $region9: #{tpu_custom_call.1} parent=1 // pred_fallthru
      _
    // Predicated region
    $region10: #{tpu_custom_call.1} parent=1 // pred_check
      _
    $region11: #{tpu_custom_call.1} parent=1 // pred_check_branch
      %36 = sbr.rel (0) target = $region13
    $region12: #{tpu_custom_call.1} parent=1 // pred_region
      _
    $region13: #{tpu_custom_call.1} parent=1 // pred_fallthru
      _
    // Predicated region
    $region14: #{tpu_custom_call.1} parent=1 // pred_check
      _
    $region15: #{tpu_custom_call.1} parent=1 // pred_check_branch
      %38 = sbr.rel (0) target = $region17
    $region16: #{tpu_custom_call.1} parent=1 // pred_region
      %39 = dma.done [#allocation4], 256
    $region17: #{tpu_custom_call.1} parent=1 // pred_fallthru
      _
    // Predicated region
    $region18: #{tpu_custom_call.1} parent=1 // pred_check
      _
    $region19: #{tpu_custom_call.1} parent=1 // pred_check_branch
      %41 = sbr.rel (0) target = $region21
    $region20: #{tpu_custom_call.1} parent=1 // pred_region
      %42 = dma.done [#allocation7], 256
    $region21: #{tpu_custom_call.1} parent=1 // pred_fallthru
      _
    %p44 = scmp.eq.s32.totalorder 0, 0
    // Predicated region
    $region22: #{tpu_custom_call.1} parent=1 // pred_check
      %p45 = pneg %p44
    $region23: #{tpu_custom_call.1} parent=1 // pred_check_branch
      %47 = sbr.rel (%p45) target = $region25
    $region24: #{tpu_custom_call.1} parent=1 // pred_region
      %vm48 = vcmask 785408
      %49 = vst.msk [vmem:[#allocation2] sm:$0xff] %vm48, 0.0
      %50 = vst.msk [vmem:[#allocation2 + $0x8] sm:$0xff] %vm48, 0.0
    $region25: #{tpu_custom_call.1} parent=1 // pred_fallthru
      _
    %v51 = vld [vmem:[#allocation2] sm:$0xff]
    %v52 = vld [vmem:[#allocation2 + $0x8] sm:$0xff]
    %v53 = vld [vmem:[#allocation3] sm:$0xff]
    %v54 = vld [vmem:[#allocation3 + $0x8] sm:$0xff]
    %v55 = vpack.c.bf16 %v54, %v53
    %v56 = vld [vmem:[#allocation6] sm:$0xf]
    %v57 = vld [vmem:[#allocation6 + $0x4] sm:$0xf]
    %v58 = vld [vmem:[#allocation6 + $0x8] sm:$0xf]
    %v59 = vld [vmem:[#allocation6 + $0xc] sm:$0xf]
    %v64 = vunpack.c.l.b16 %v56
    %v65 = vunpack.c.l.b16 %v57
    %v66 = vunpack.c.l.b16 %v58
    %v67 = vunpack.c.l.b16 %v59
    %v68 = vpack.c.b16 %v65, %v64
    %v69 = vpack.c.b16 %v67, %v66
    %vm72 = vcmask 261120
    %v74 = vsel %vm72, %v55, 0
    %76 = vmatprep.subr.bf16.mxu0 0
    %77 = vmatpush1.bf16.msra.mxu0 0
    %78 = vmatprep.subr.bf16.mxu0 0
    %79 = vmatpush1.bf16.msra.mxu0 0
    %80 = vmatprep.subr.bf16.mxu0 0
    %81 = vmatpush1.bf16.msra.mxu0 0
    %82 = vmatprep.subr.bf16.mxu0 0
    %83 = vmatpush1.bf16.msra.mxu0 0
    %84 = vmatprep.subr.bf16.mxu0 0
    %85 = vmatpush1.bf16.msra.mxu0 0
    %86 = vmatprep.subr.bf16.mxu0 0
    %87 = vmatpush1.bf16.msra.mxu0 0
    %88 = vmatprep.subr.bf16.mxu0 0
    %89 = vmatpush1.bf16.msra.mxu0 %v69
    %90 = vmatprep.subr.bf16.mxu0 0
    %91 = vmatpush1.bf16.msra.mxu0 %v68
    %92 = vmatprep.subr.bf16.mxu0 0
    %93 = vmatpush2.bf16.msra.mxu0 0
    %94 = vmatprep.subr.bf16.mxu0 0
    %95 = vmatpush2.bf16.msra.mxu0 0
    %96 = vmatprep.subr.bf16.mxu0 0
    %97 = vmatpush2.bf16.msra.mxu0 0
    %98 = vmatprep.subr.bf16.mxu0 0
    %99 = vmatpush2.bf16.msra.mxu0 0
    %100 = vmatprep.subr.bf16.mxu0 0
    %101 = vmatpush2.bf16.msra.mxu0 0
    %102 = vmatprep.subr.bf16.mxu0 0
    %103 = vmatpush2.bf16.msra.mxu0 0
    %104 = vmatprep.subr.bf16.mxu0 0
    %105 = vmatpush2.bf16.msra.mxu0 0
    %106 = vmatprep.subr.bf16.mxu0 0
    %107 = vmatpush2.bf16.msra.mxu0 0
    %108 = vmatprep.mubr.bf16.mxu0 0
    %109 = vmatmul.mubr.bf16.gmra.mxu0 %v74
    %v110 = vpop.f32.mrf.mxu0
    %v111 = vadd.f32 0.0, %v110
    %v112 = vpop.f32.mrf.mxu0
    %v113 = vpop.f32.mrf.mxu0
    %v114 = vadd.f32 0.0, %v113
    %v115 = vpop.f32.mrf.mxu0
    %116 = vdwg.mxu0
    %v117 = vadd.f32 %v51, %v111
    %v118 = vadd.f32 %v52, %v114
    %vm119 = vcmask 785408
    %120 = vst.msk [vmem:[#allocation2] sm:$0xff] %vm119, %v117
    %121 = vst.msk [vmem:[#allocation2 + $0x8] sm:$0xff] %vm119, %v118
    // Predicated region
    $region26: #{tpu_custom_call.1} parent=1 // pred_check
      %p122 = pneg %p44
    $region27: #{tpu_custom_call.1} parent=1 // pred_check_branch
      %124 = sbr.rel (%p122) target = $region29
    $region28: #{tpu_custom_call.1} parent=1 // pred_region
      %v125 = vld [vmem:[#allocation2] sm:$0xff]
      %v126 = vld [vmem:[#allocation2 + $0x8] sm:$0xff]
      %v127 = vld [vmem:[%s2] sm:$0x1]
      %v129 = vlaneseq
      %v130 = vshrl.u32 %v129, 7
      %v131 = vsub.s32 0, %v130
      %v132 = vrot.slane %v127, %v131
      %v134 = vadd.f32 %v125, %v132
      %v135 = vadd.f32 %v126, %v132
      %136 = vst.msk [vmem:[#allocation8] sm:$0xff] %vm119, %v134
      %137 = vst.msk [vmem:[#allocation8 + $0x8] sm:$0xff] %vm119, %v135
    $region29: #{tpu_custom_call.1} parent=1 // pred_fallthru
      _
    // Predicated region
    $region30: #{tpu_custom_call.1} parent=1 // pred_check
      _
    $region31: #{tpu_custom_call.1} parent=1 // pred_check_branch
      %139 = sbr.rel (0) target = $region33
    $region32: #{tpu_custom_call.1} parent=1 // pred_region
      %s141 = ssub.s32 256, 256
      %142 = vsyncadd [#allocation5], %s141
      %s143 = sshll.u32 [#allocation8], 4
      %s144 = int_to_ptr.vmem [resolvable:$true] %s143
      %149 = dma.vmem_to_hbm [thread:$0]  %s144, 256, %s3, [#allocation5], 128, 128, 8
    $region33: #{tpu_custom_call.1} parent=1 // pred_fallthru
      _
    // Predicated region
    $region34: #{tpu_custom_call.1} parent=1 // pred_check
      _
    $region35: #{tpu_custom_call.1} parent=1 // pred_check_branch
      %151 = sbr.rel (0) target = $region37
    $region36: #{tpu_custom_call.1} parent=1 // pred_region
      %152 = dma.done [#allocation5], 256
    $region37: #{tpu_custom_call.1} parent=1 // pred_fallthru
      _
    %153 = vsyncpa [#allocation4], 1
    %154 = vsyncpa [#allocation7], 1
    %155 = vsyncpa [#allocation5], 1

</llo_original>
